<compile_context>
chip_gen: v7x
topology: tpu7x:2x2x1
jax: 0.10.0
libtpu: 0.0.40
codegen_flags: <defaults>
</compile_context>

<pallas_src>
import functools
import math

import jax
import jax.numpy as jnp
from jax import lax
from jax.experimental import pallas as pl
from jax.experimental.pallas import tpu as pltpu


def _round_up(x, m):
    return ((x + m - 1) // m) * m


_SQRT_2_OVER_PI = 0.7978845608028654
_GELU_C = 0.044715


def _gelu_tanh(x):
    # tanh-form GELU: the tanh lowers to the EUP (its own VLIW slot), so the
    # gate costs a handful of VALU ops instead of the erf polynomial + divide.
    return 0.5 * x * (1.0 + jnp.tanh(_SQRT_2_OVER_PI * (x + _GELU_C * x * x * x)))


@functools.partial(jax.jit, static_argnames=("tm",))
def gcfn3d_pallas(x, w_in, w_conv, w_out, *, tm=512):
    """Fused GCFN3D forward.

    x:      (B, C, D, H, W)  f32 (NCDHW, like torch)
    w_in:   (2h, C, 1, 1, 1)   project_in  (bias=False)
    w_conv: (2h, 2h, 1, 3, 3)  conv, padding (0,1,1) (bias=False)
    w_out:  (C, h, 1, 1, 1)    project_out (bias=False)
    """
    B, C, D, H, W = x.shape
    C2h = w_in.shape[0]
    hid = C2h // 2
    Cout = w_out.shape[0]

    K = _round_up(9 * C, 128)      # packed contraction axis: tap x channel
    HP = _round_up(hid, 128)       # gate / value half, each a lane multiple
    N2 = 2 * HP                    # [gate | value] accumulator width
    Coutp = _round_up(Cout, 128)   # lane-dense output width

    R = B * D * H * W              # one row per output voxel (no padded rows)

    # Row tile: big for HBM efficiency, but keep >= 4 grid steps when the row
    # count allows it (both v7x TensorCores busy + pipeline filled).
    TM = min(tm, _round_up(R, 16))
    while TM > 128 and -(-R // TM) < 4:
        TM = _round_up(TM // 2, 16)
    TM = max(TM, 16)
    n_tiles = -(-R // TM)
    r_out = n_tiles * TM

    # ---- activation: channels-last + spatial zero-pad + packed im2col ------
    # Pure layout plumbing, done once outside the kernel.  For the small C
    # this module uses, a packed row is a single 128-lane vector, so the
    # kernel input stream carries no more bytes than the raw padded channels
    # would have.  (In a full model, keep activations channels-last across
    # layers to avoid the NCDHW transpose passes.)
    xcl = jnp.transpose(x, (0, 2, 3, 4, 1))                       # (B,D,H,W,C)
    xpad = jnp.pad(xcl, ((0, 0), (0, 0), (1, 1), (1, 1), (0, 0)))
    taps = [xpad[:, :, kh:kh + H, kw:kw + W, :]
            for kh in range(3) for kw in range(3)]                # t = kh*3+kw
    xim = jnp.concatenate(taps, axis=-1).reshape(R, 9 * C)        # (R, 9C)
    xim = jnp.pad(xim, ((0, r_out - R), (0, K - 9 * C))).astype(jnp.bfloat16)

    # ---- weights: fold project_in into the 9 conv taps (exact, in f32) -----
    win = w_in.reshape(C2h, C).astype(jnp.float32)                # (2h, C)
    wc = w_conv.reshape(C2h, C2h, 9).astype(jnp.float32)          # (2h, 2h, 9)
    # M[t, c, o] = sum_i wc[o, i, t] * win[i, c]
    m_tap = jnp.einsum("oit,ic->tco", wc, win)                    # (9, C, 2h)
    m_flat = m_tap.reshape(9 * C, C2h)                            # row = t*C + c
    wt = jnp.zeros((K, N2), jnp.float32)
    wt = wt.at[:9 * C, :hid].set(m_flat[:, :hid])                 # gate half
    wt = wt.at[:9 * C, HP:HP + hid].set(m_flat[:, hid:])          # value half
    wt = wt.astype(jnp.bfloat16)

    wo = jnp.zeros((HP, Coutp), jnp.float32)
    wo = wo.at[:hid, :Cout].set(w_out.reshape(Cout, hid).T.astype(jnp.float32))
    wo = wo.astype(jnp.bfloat16)

    def kernel(xim_ref, wt_ref, wo_ref, o_ref):
        # Fused project_in + (1,3,3) conv: one bf16 MXU matmul, f32 accumulate.
        acc = jnp.dot(xim_ref[...], wt_ref[...],
                      preferred_element_type=jnp.float32)          # (TM, N2)
        # Epilogue: GELU gate (EUP tanh) + project_out.  The gate / value
        # halves sit on 128-lane boundaries, so the slices are vreg-aligned.
        gate = _gelu_tanh(acc[:, :HP]) * acc[:, HP:]
        o_ref[...] = jnp.dot(gate.astype(jnp.bfloat16), wo_ref[...],
                             preferred_element_type=jnp.float32
                             ).astype(o_ref.dtype)

    # VMEM budget (double-buffered inputs/outputs + in-kernel f32 temporaries).
    # The constant-index weight specs are still double-buffered by the
    # pipeline; at these sizes that is negligible.  For production hid on v7x
    # they should be K-tiled or single-buffered instead (see module comment).
    vmem_bytes = (2 * TM * K * 2          # packed input tile, bf16
                  + 2 * K * N2 * 2        # folded tap weights
                  + 2 * HP * Coutp * 2    # project_out weights
                  + 2 * TM * Coutp * 2    # output tile, bf16
                  + TM * N2 * 4           # f32 accumulator value
                  + TM * HP * 4)          # f32 gate value
    vmem_limit = int(min(96 * 2 ** 20, max(16 * 2 ** 20, 2 * vmem_bytes)))

    out = pl.pallas_call(
        kernel,
        out_shape=jax.ShapeDtypeStruct((r_out, Coutp), jnp.bfloat16),
        grid=(n_tiles,),
        in_specs=[
            pl.BlockSpec((TM, K), lambda m: (m, 0)),      # packed row tile m
            pl.BlockSpec((K, N2), lambda m: (0, 0)),      # folded tap weights
            pl.BlockSpec((HP, Coutp), lambda m: (0, 0)),  # project_out weights
        ],
        out_specs=pl.BlockSpec((TM, Coutp), lambda m: (m, 0)),
        compiler_params=pltpu.CompilerParams(
            dimension_semantics=("parallel",),
            vmem_limit_bytes=vmem_limit),
    )(xim, wt, wo)

    out = out[:R].reshape(B, D, H, W, Coutp)[..., :Cout]
    return jnp.transpose(out, (0, 4, 1, 2, 3)).astype(x.dtype)


def gcfn3d_reference(x, w_in, w_conv, w_out):
    """Pure-JAX reference of the original PyTorch module (f32 end-to-end)."""
    dn = ("NCDHW", "OIDHW", "NCDHW")
    y = lax.conv_general_dilated(x, w_in, (1, 1, 1),
                                 [(0, 0), (0, 0), (0, 0)],
                                 dimension_numbers=dn)
    y = lax.conv_general_dilated(y, w_conv, (1, 1, 1),
                                 [(0, 0), (1, 1), (1, 1)],
                                 dimension_numbers=dn)
    x1, x2 = jnp.split(y, 2, axis=1)
    g = jax.nn.gelu(x1, approximate=False) * x2
    return lax.conv_general_dilated(g, w_out, (1, 1, 1),
                                    [(0, 0), (0, 0), (0, 0)],
                                    dimension_numbers=dn)


if __name__ == "__main__":
    key = jax.random.PRNGKey(0)
    kx, k1, k2, k3 = jax.random.split(key, 4)

    B, C, D, H, W = 2, 8, 4, 8, 8
    expansion_factor = 2.66
    hid = int(C * expansion_factor)          # 21

    def uniform_like_torch(k, shape, fan_in):
        bound = 1.0 / math.sqrt(fan_in)
        return jax.random.uniform(k, shape, jnp.float32, -bound, bound)

    x = jax.random.normal(kx, (B, C, D, H, W), dtype=jnp.float32)
    w_in = uniform_like_torch(k1, (2 * hid, C, 1, 1, 1), C)
    w_conv = uniform_like_torch(k2, (2 * hid, 2 * hid, 1, 3, 3), 2 * hid * 9)
    w_out = uniform_like_torch(k3, (C, hid, 1, 1, 1), hid)

    out = jax.block_until_ready(gcfn3d_pallas(x, w_in, w_conv, w_out))
    assert out.shape == (B, C, D, H, W), out.shape
    assert bool(jnp.all(jnp.isfinite(out)))

    ref = jax.block_until_ready(gcfn3d_reference(x, w_in, w_conv, w_out))
    rel = float(jnp.linalg.norm(out - ref) / (jnp.linalg.norm(ref) + 1e-8))
    # Tightened vs the previous 0.1 tolerance; headroom covers bf16 operands,
    # the bf16 output store and the tanh-form GELU (all within ~1% rel-L2).
    assert rel < 3e-2, f"kernel/reference mismatch: rel-L2 err = {rel:.3e}"

    print("KERNEL_OK")
</pallas_src>

<mosaic_0001>
module attributes {stable_mosaic.version = 11 : i64} {
  func.func @kernel(%arg0: i32, %arg1: memref<128x128xbf16, #tpu.memory_space<vmem>>, %arg2: memref<128x256xbf16, #tpu.memory_space<vmem>>, %arg3: memref<128x128xbf16, #tpu.memory_space<vmem>>, %arg4: memref<128x128xbf16, #tpu.memory_space<vmem>>) attributes {dimension_semantics = [#tpu.dimension_semantics<parallel>], iteration_bounds = array<i64: 4>, scalar_prefetch = 0 : i64, scratch_operands = 0 : i64, tpu.core_type = #tpu.core_type<tc>, window_params = [{transform_indices = @transform_0, window_bounds = array<i64: 128, 128>}, {pipeline_mode = #tpu.pipeline_mode<synchronous>, transform_indices = @transform_1, window_bounds = array<i64: 128, 256>}, {pipeline_mode = #tpu.pipeline_mode<synchronous>, transform_indices = @transform_2, window_bounds = array<i64: 128, 128>}, {transform_indices = @transform_3, window_bounds = array<i64: 128, 128>}]} {
    %c0 = arith.constant 0 : index
    %c0_0 = arith.constant 0 : index
    %0 = vector.load %arg1[%c0, %c0_0] : memref<128x128xbf16, #tpu.memory_space<vmem>>, vector<128x128xbf16>
    %c0_1 = arith.constant 0 : index
    %c0_2 = arith.constant 0 : index
    %1 = vector.load %arg2[%c0_1, %c0_2] : memref<128x256xbf16, #tpu.memory_space<vmem>>, vector<128x256xbf16>
    %cst = arith.constant dense<0.000000e+00> : vector<128x256xf32>
    %2 = tpu.matmul %0, %1, %cst {dimension_numbers = #tpu.dot_dimension_numbers<[1], [0], [0], [1], [0, 0, 1, 1], [], []>} : vector<128x128xbf16>, vector<128x256xbf16>, vector<128x256xf32> -> vector<128x256xf32>
    %3 = vector.extract_strided_slice %2 {offsets = [0, 0], sizes = [128, 128], strides = [1, 1]} : vector<128x256xf32> to vector<128x128xf32>
    %cst_3 = arith.constant 5.000000e-01 : f32
    %4 = vector.broadcast %cst_3 : f32 to vector<128x128xf32>
    %5 = arith.mulf %4, %3 : vector<128x128xf32>
    %cst_4 = arith.constant 4.471500e-02 : f32
    %6 = vector.broadcast %cst_4 : f32 to vector<128x128xf32>
    %7 = arith.mulf %6, %3 : vector<128x128xf32>
    %8 = arith.mulf %7, %3 : vector<128x128xf32>
    %9 = arith.mulf %8, %3 : vector<128x128xf32>
    %10 = arith.addf %3, %9 : vector<128x128xf32>
    %cst_5 = arith.constant 0.797884583 : f32
    %11 = vector.broadcast %cst_5 : f32 to vector<128x128xf32>
    %12 = arith.mulf %11, %10 : vector<128x128xf32>
    %13 = math.tanh %12 : vector<128x128xf32>
    %cst_6 = arith.constant 1.000000e+00 : f32
    %14 = vector.broadcast %cst_6 : f32 to vector<128x128xf32>
    %15 = arith.addf %14, %13 : vector<128x128xf32>
    %16 = arith.mulf %5, %15 : vector<128x128xf32>
    %17 = vector.extract_strided_slice %2 {offsets = [0, 128], sizes = [128, 128], strides = [1, 1]} : vector<128x256xf32> to vector<128x128xf32>
    %18 = arith.mulf %16, %17 : vector<128x128xf32>
    %19 = arith.truncf %18 : vector<128x128xf32> to vector<128x128xbf16>
    %c0_7 = arith.constant 0 : index
    %c0_8 = arith.constant 0 : index
    %20 = vector.load %arg3[%c0_7, %c0_8] : memref<128x128xbf16, #tpu.memory_space<vmem>>, vector<128x128xbf16>
    %cst_9 = arith.constant dense<0.000000e+00> : vector<128x128xf32>
    %21 = tpu.matmul %19, %20, %cst_9 {dimension_numbers = #tpu.dot_dimension_numbers<[1], [0], [0], [1], [0, 0, 1, 1], [], []>} : vector<128x128xbf16>, vector<128x128xbf16>, vector<128x128xf32> -> vector<128x128xf32>
    %22 = arith.truncf %21 : vector<128x128xf32> to vector<128x128xbf16>
    %c0_10 = arith.constant 0 : index
    %c0_11 = arith.constant 0 : index
    %23 = vector.load %arg4[%c0_10, %c0_11] : memref<128x128xbf16, #tpu.memory_space<vmem>>, vector<128x128xbf16>
    tpu.vector_store %arg4[%c0_10, %c0_11], %22 {strides = array<i32>} : memref<128x128xbf16, #tpu.memory_space<vmem>>, vector<128x128xbf16>,
    return
  }
  func.func @transform_0(%arg0: i32) -> (i32, i32) {
    %c0_i32 = arith.constant 0 : i32
    %c0_i32_0 = arith.constant 0 : i32
    return %arg0, %c0_i32 : i32, i32
  }
  func.func @transform_1(%arg0: i32) -> (i32, i32) {
    %c0_i32 = arith.constant 0 : i32
    %c0_i32_0 = arith.constant 0 : i32
    %c0_i32_1 = arith.constant 0 : i32
    return %c0_i32, %c0_i32_0 : i32, i32
  }
  func.func @transform_2(%arg0: i32) -> (i32, i32) {
    %c0_i32 = arith.constant 0 : i32
    %c0_i32_0 = arith.constant 0 : i32
    %c0_i32_1 = arith.constant 0 : i32
    return %c0_i32, %c0_i32_0 : i32, i32
  }
  func.func @transform_3(%arg0: i32) -> (i32, i32) {
    %c0_i32 = arith.constant 0 : i32
    %c0_i32_0 = arith.constant 0 : i32
    return %arg0, %c0_i32 : i32, i32
  }
}

</mosaic_0001>

<llo_original>
// kernel: gcfn3d_pallas.1
$region0: #{gcfn3d_pallas.1}
  #allocation0 [shape = 'u32[]', space=smem, size = 0x4, offset = 0x4, fixed_abs, tag = 'smem constant byte address 0x4 - core index']
  #allocation1 [shape = 'u32[144,128]{1,0:T(1,128)}', space=vmem, size = 0x12000, scoped, tag = 'internal scratch']
  %s0 = inlined_call_operand.vmem [shape: bf16[512,128], index: 0, kind: input, shape index: {}]
  %s1 = inlined_call_operand.vmem [shape: bf16[128,256], index: 1, kind: input, shape index: {}]
  %s2 = inlined_call_operand.vmem [shape: bf16[128,128], index: 2, kind: input, shape index: {}]
  %s3 = inlined_call_operand.vmem [shape: bf16[512,128], index: 3, kind: output, shape index: {}]
  %s4 = sld [smem:[#allocation0]]
  $region45: #{gcfn3d_pallas.1} parent=0
    _
  %s6 = ssub.s32 1, %s4
  %s7 = scalar_select 0, %s6, %s4
  loop: start=0, step=1, limit=6
  $region2: #{gcfn3d_pallas.1} parent=0 // loop_pre_header
    _
  $region3: #{gcfn3d_pallas.1} parent=0 // loop_header
    %s9 = sphi 0, %s13
    %p10 = scmp.ge.s32.totalorder %s9, 6
    %s19 = sphi 0, %s21
    %s22 = sphi 0, %s19
    %s23 = sphi 0, %s22
    %s39 = sphi 0, %s23
    %s43 = sphi 0, %s43
    %s45 = sphi 0, %s43
    %s46 = sphi 0, %s45
    %s60 = sphi 0, %s46
    %s64 = sphi 0, %s64
    %s66 = sphi 0, %s64
    %s67 = sphi 0, %s66
    %s81 = sphi 0, %s67
    %s87 = sphi 0, %s89
    %s90 = sphi 0, %s87
    %s91 = sphi 0, %s90
    %s107 = sphi 0, %s91
  $region4: #{gcfn3d_pallas.1} parent=0 // loop_header_branch
    %12 = sbr.rel (%p10) target = $region8
  $region5: #{gcfn3d_pallas.1} parent=0 // loop_body
    %s14 = ssub.s32 %s9, 1
    %s15 = ssub.s32 %s9, 2
    %s16 = sadd.s32 %s9, 1
    %s17 = ssub.s32 %s9, %s16
    %p18 = scmp.eq.s32.totalorder %s17, 0
    %s20 = sadd.s32 %s19, 1
    %s21 = scalar_select %p18, %s19, %s20
    %p24 = pneg %p18
    %p25 = scmp.eq.s32.totalorder %s9, 3
    %p26 = por %p24, %p25
    %p27 = scmp.ne.s32.totalorder %s19, %s22
    %p28 = scmp.eq.s32.totalorder %s9, 0
    %p29 = por %p27, %p28
    %p30 = scmp.ne.s32.totalorder %s19, %s22
    %p31 = scmp.eq.s32.totalorder %s14, 3
    %p32 = por %p30, %p31
    %p33 = scmp.ne.s32.totalorder %s22, %s23
    %p34 = scmp.eq.s32.totalorder %s14, 0
    %p35 = por %p33, %p34
    %p36 = scmp.ne.s32.totalorder %s22, %s23
    %p37 = scmp.eq.s32.totalorder %s15, 3
    %p38 = por %p36, %p37
    %p40 = scmp.ne.s32.totalorder %s23, %s39
    %p41 = scmp.eq.s32.totalorder %s15, 0
    %p42 = por %p40, %p41
    %s44 = sadd.s32 %s43, 1
    %p47 = scmp.eq.s32.totalorder %s9, 3
    %p48 = scmp.ne.s32.totalorder %s43, %s45
    %p49 = scmp.eq.s32.totalorder %s9, 0
    %p50 = por %p48, %p49
    %p51 = scmp.ne.s32.totalorder %s43, %s45
    %p52 = scmp.eq.s32.totalorder %s14, 3
    %p53 = por %p51, %p52
    %p54 = scmp.ne.s32.totalorder %s45, %s46
    %p55 = scmp.eq.s32.totalorder %s14, 0
    %p56 = por %p54, %p55
    %p57 = scmp.ne.s32.totalorder %s45, %s46
    %p58 = scmp.eq.s32.totalorder %s15, 3
    %p59 = por %p57, %p58
    %p61 = scmp.ne.s32.totalorder %s46, %s60
    %p62 = scmp.eq.s32.totalorder %s15, 0
    %p63 = por %p61, %p62
    %s65 = sadd.s32 %s64, 1
    %p68 = scmp.eq.s32.totalorder %s9, 3
    %p69 = scmp.ne.s32.totalorder %s64, %s66
    %p70 = scmp.eq.s32.totalorder %s9, 0
    %p71 = por %p69, %p70
    %p72 = scmp.ne.s32.totalorder %s64, %s66
    %p73 = scmp.eq.s32.totalorder %s14, 3
    %p74 = por %p72, %p73
    %p75 = scmp.ne.s32.totalorder %s66, %s67
    %p76 = scmp.eq.s32.totalorder %s14, 0
    %p77 = por %p75, %p76
    %p78 = scmp.ne.s32.totalorder %s66, %s67
    %p79 = scmp.eq.s32.totalorder %s15, 3
    %p80 = por %p78, %p79
    %p82 = scmp.ne.s32.totalorder %s67, %s81
    %p83 = scmp.eq.s32.totalorder %s15, 0
    %p84 = por %p82, %p83
    %s85 = ssub.s32 %s9, %s16
    %p86 = scmp.eq.s32.totalorder %s85, 0
    %s88 = sadd.s32 %s87, 1
    %s89 = scalar_select %p86, %s87, %s88
    %p92 = pneg %p86
    %p93 = scmp.eq.s32.totalorder %s9, 3
    %p94 = por %p92, %p93
    %p95 = scmp.ne.s32.totalorder %s87, %s90
    %p96 = scmp.eq.s32.totalorder %s9, 0
    %p97 = por %p95, %p96
    %p98 = scmp.ne.s32.totalorder %s87, %s90
    %p99 = scmp.eq.s32.totalorder %s14, 3
    %p100 = por %p98, %p99
    %p101 = scmp.ne.s32.totalorder %s90, %s91
    %p102 = scmp.eq.s32.totalorder %s14, 0
    %p103 = por %p101, %p102
    %p104 = scmp.ne.s32.totalorder %s90, %s91
    %p105 = scmp.eq.s32.totalorder %s15, 3
    %p106 = por %p104, %p105
    %p108 = scmp.ne.s32.totalorder %s91, %s107
    %p109 = scmp.eq.s32.totalorder %s15, 0
    %p110 = por %p108, %p109
    %p111 = scmp.le.s32.totalorder 1, %s9
    %p112 = scmp.lt.s32.totalorder %s9, 5
    %p113 = pnand %p111, %p112
    %p114 = pneg %p113
    // Predicated region
    $region9: #{gcfn3d_pallas.1} parent=5 // pred_check
      _
    $region10: #{gcfn3d_pallas.1} parent=5 // pred_check_branch
      %116 = sbr.rel (%p113) target = $region12
    $region11: #{gcfn3d_pallas.1} parent=5 // pred_region
      %s117 = ssub.s32 %s9, 1
      // Predicated region
      $region13: #{gcfn3d_pallas.1} parent=11 // pred_check
        %p118 = pneg %p56
      $region14: #{gcfn3d_pallas.1} parent=11 // pred_check_branch
        %120 = sbr.rel (%p118) target = $region16
      $region15: #{gcfn3d_pallas.1} parent=11 // pred_region
        _
      $region16: #{gcfn3d_pallas.1} parent=11 // pred_fallthru
        _
      // Predicated region
      $region17: #{gcfn3d_pallas.1} parent=11 // pred_check
        %p121 = pneg %p77
      $region18: #{gcfn3d_pallas.1} parent=11 // pred_check_branch
        %123 = sbr.rel (%p121) target = $region20
      $region19: #{gcfn3d_pallas.1} parent=11 // pred_region
        _
      $region20: #{gcfn3d_pallas.1} parent=11 // pred_fallthru
        _
    $region12: #{gcfn3d_pallas.1} parent=5 // pred_fallthru
      _
    %p124 = scmp.lt.s32.totalorder %s9, 4
    // Predicated region
    $region21: #{gcfn3d_pallas.1} parent=5 // pred_check
      %p125 = pneg %p124
    $region22: #{gcfn3d_pallas.1} parent=5 // pred_check_branch
      %127 = sbr.rel (%p125) target = $region24
    $region23: #{gcfn3d_pallas.1} parent=5 // pred_region
      // Predicated region
      $region25: #{gcfn3d_pallas.1} parent=23 // pred_check
        %p128 = pneg %p29
      $region26: #{gcfn3d_pallas.1} parent=23 // pred_check_branch
        %130 = sbr.rel (%p128) target = $region28
      $region27: #{gcfn3d_pallas.1} parent=23 // pred_region
        %s131 = smul.u32 16, %s9
        %p132 = scmp.lt.s32.totalorder %s131, 63
        %s133 = scalar_select %p132, %s131, 63
        %s134 = smul.addr %s133, 4
        %s135 = scalar_lea.vmem %s0, %s134
        %s136 = smul.u32 16, %s9
      $region28: #{gcfn3d_pallas.1} parent=23 // pred_fallthru
        _
    $region24: #{gcfn3d_pallas.1} parent=5 // pred_fallthru
      _
    %p137 = scmp.le.s32.totalorder 1, %s9
    %p138 = scmp.lt.s32.totalorder %s9, 5
    %p139 = pnand %p137, %p138
    %p140 = pneg %p139
    // Predicated region
    $region29: #{gcfn3d_pallas.1} parent=5 // pred_check
      _
    $region30: #{gcfn3d_pallas.1} parent=5 // pred_check_branch
      %142 = sbr.rel (%p139) target = $region32
    $region31: #{gcfn3d_pallas.1} parent=5 // pred_region
      %s143 = ssub.s32 %s9, 1
      %s144 = smul.u32 16, %s14
      %p145 = scmp.lt.s32.totalorder %s144, 63
      %s146 = scalar_select %p145, %s144, 63
      %s147 = smul.addr %s146, 4
      %s148 = scalar_lea.vmem %s0, %s147
      %p149 = pneg %p35
      %p150 = pneg %p32
      %p151 = pneg %p56
      %p152 = pneg %p53
      %p153 = pneg %p77
      %p154 = pneg %p74
      %p155 = pneg %p103
      %p156 = pneg %p100
      %s157 = smul.u32 16, %s14
      %p158 = scmp.lt.s32.totalorder %s157, 63
      %s159 = scalar_select %p158, %s157, 63
      %s160 = smul.addr %s159, 4
      %s161 = scalar_lea.vmem %s3, %s160
      %s162 = smul.u32 16, %s14
      %p163 = scmp.lt.s32.totalorder %s162, 63
      %s164 = scalar_select %p163, %s162, 63
      %s165 = smul.addr %s164, 4
      %s166 = scalar_lea.vmem %s0, %s165
      %s167 = smul.u32 16, %s14
      %s168 = smul.u32 16, %s14
      %p169 = scmp.lt.s32.totalorder %s168, 63
      %s170 = scalar_select %p169, %s168, 63
      %s171 = smul.addr %s170, 4
      %s172 = scalar_lea.vmem %s3, %s171
      %s173 = smul.u32 16, %s14
      %v175 = vld [vmem:[%s166] sm:$0xf]
      %v176 = vld [vmem:[%s166 + $0x4] sm:$0xf]
      %v177 = vld [vmem:[%s166 + $0x8] sm:$0xf]
      %v178 = vld [vmem:[%s166 + $0xc] sm:$0xf]
      %v179 = vld [vmem:[%s166 + $0x10] sm:$0xf]
      %v180 = vld [vmem:[%s166 + $0x14] sm:$0xf]
      %v181 = vld [vmem:[%s166 + $0x18] sm:$0xf]
      %v182 = vld [vmem:[%s166 + $0x1c] sm:$0xf]
      %v183 = vld [vmem:[%s166 + $0x20] sm:$0xf]
      %v184 = vld [vmem:[%s166 + $0x24] sm:$0xf]
      %v185 = vld [vmem:[%s166 + $0x28] sm:$0xf]
      %v186 = vld [vmem:[%s166 + $0x2c] sm:$0xf]
      %v187 = vld [vmem:[%s166 + $0x30] sm:$0xf]
      %v188 = vld [vmem:[%s166 + $0x34] sm:$0xf]
      %v189 = vld [vmem:[%s166 + $0x38] sm:$0xf]
      %v190 = vld [vmem:[%s166 + $0x3c] sm:$0xf]
      %v191 = vld [vmem:[%s1] sm:$0xff]
      %v192 = vld [vmem:[%s1 + $0x8] sm:$0xff]
      %v193 = vld [vmem:[%s1 + $0x10] sm:$0xff]
      %v194 = vld [vmem:[%s1 + $0x18] sm:$0xff]
      %v195 = vld [vmem:[%s1 + $0x20] sm:$0xff]
      %v196 = vld [vmem:[%s1 + $0x28] sm:$0xff]
      %v197 = vld [vmem:[%s1 + $0x30] sm:$0xff]
      %v198 = vld [vmem:[%s1 + $0x38] sm:$0xff]
      %v199 = vld [vmem:[%s1 + $0x40] sm:$0xff]
      %v200 = vld [vmem:[%s1 + $0x48] sm:$0xff]
      %v201 = vld [vmem:[%s1 + $0x50] sm:$0xff]
      %v202 = vld [vmem:[%s1 + $0x58] sm:$0xff]
      %v203 = vld [vmem:[%s1 + $0x60] sm:$0xff]
      %v204 = vld [vmem:[%s1 + $0x68] sm:$0xff]
      %v205 = vld [vmem:[%s1 + $0x70] sm:$0xff]
      %v206 = vld [vmem:[%s1 + $0x78] sm:$0xff]
      %v223 = vunpack.c.l.b16 %v175
      %v224 = vunpack.c.l.b16 %v176
      %v225 = vunpack.c.l.b16 %v177
      %v226 = vunpack.c.l.b16 %v178
      %v227 = vunpack.c.l.b16 %v179
      %v228 = vunpack.c.l.b16 %v180
      %v229 = vunpack.c.l.b16 %v181
      %v230 = vunpack.c.l.b16 %v182
      %v231 = vunpack.c.l.b16 %v183
      %v232 = vunpack.c.l.b16 %v184
      %v233 = vunpack.c.l.b16 %v185
      %v234 = vunpack.c.l.b16 %v186
      %v235 = vunpack.c.l.b16 %v187
      %v236 = vunpack.c.l.b16 %v188
      %v237 = vunpack.c.l.b16 %v189
      %v238 = vunpack.c.l.b16 %v190
      %v239 = vpack.c.b16 %v224, %v223
      %v240 = vpack.c.b16 %v226, %v225
      %v241 = vpack.c.b16 %v228, %v227
      %v242 = vpack.c.b16 %v230, %v229
      %v243 = vpack.c.b16 %v232, %v231
      %v244 = vpack.c.b16 %v234, %v233
      %v245 = vpack.c.b16 %v236, %v235
      %v246 = vpack.c.b16 %v238, %v237
      %v271 = vunpack.c.l.b16 %v191
      %v272 = vunpack.c.h.b16 %v191
      %v273 = vunpack.c.l.b16 %v192
      %v274 = vunpack.c.h.b16 %v192
      %v275 = vunpack.c.l.b16 %v193
      %v276 = vunpack.c.h.b16 %v193
      %v277 = vunpack.c.l.b16 %v194
      %v278 = vunpack.c.h.b16 %v194
      %v279 = vunpack.c.l.b16 %v195
      %v280 = vunpack.c.h.b16 %v195
      %v281 = vunpack.c.l.b16 %v196
      %v282 = vunpack.c.h.b16 %v196
      %v283 = vunpack.c.l.b16 %v197
      %v284 = vunpack.c.h.b16 %v197
      %v285 = vunpack.c.l.b16 %v198
      %v286 = vunpack.c.h.b16 %v198
      %v287 = vunpack.c.l.b16 %v199
      %v288 = vunpack.c.h.b16 %v199
      %v289 = vunpack.c.l.b16 %v200
      %v290 = vunpack.c.h.b16 %v200
      %v291 = vunpack.c.l.b16 %v201
      %v292 = vunpack.c.h.b16 %v201
      %v293 = vunpack.c.l.b16 %v202
      %v294 = vunpack.c.h.b16 %v202
      %v295 = vunpack.c.l.b16 %v203
      %v296 = vunpack.c.h.b16 %v203
      %v297 = vunpack.c.l.b16 %v204
      %v298 = vunpack.c.h.b16 %v204
      %v299 = vunpack.c.l.b16 %v205
      %v300 = vunpack.c.h.b16 %v205
      %v301 = vunpack.c.l.b16 %v206
      %v302 = vunpack.c.h.b16 %v206
      %v303 = vpack.c.b16 %v273, %v271
      %v304 = vpack.c.b16 %v274, %v272
      %v305 = vpack.c.b16 %v277, %v275
      %v306 = vpack.c.b16 %v278, %v276
      %v307 = vpack.c.b16 %v281, %v279
      %v308 = vpack.c.b16 %v282, %v280
      %v309 = vpack.c.b16 %v285, %v283
      %v310 = vpack.c.b16 %v286, %v284
      %v311 = vpack.c.b16 %v289, %v287
      %v312 = vpack.c.b16 %v290, %v288
      %v313 = vpack.c.b16 %v293, %v291
      %v314 = vpack.c.b16 %v294, %v292
      %v315 = vpack.c.b16 %v297, %v295
      %v316 = vpack.c.b16 %v298, %v296
      %v317 = vpack.c.b16 %v301, %v299
      %v318 = vpack.c.b16 %v302, %v300
      %335 = vmatprep.subr.bf16.mxu0 %v304
      %336 = vmatpush1.bf16.msra.mxu0 %v303
      %337 = vmatprep.subr.bf16.mxu0 %v306
      %338 = vmatpush1.bf16.msra.mxu0 %v305
      %339 = vmatprep.subr.bf16.mxu0 %v308
      %340 = vmatpush1.bf16.msra.mxu0 %v307
      %341 = vmatprep.subr.bf16.mxu0 %v310
      %342 = vmatpush1.bf16.msra.mxu0 %v309
      %343 = vmatprep.subr.bf16.mxu0 %v312
      %344 = vmatpush1.bf16.msra.mxu0 %v311
      %345 = vmatprep.subr.bf16.mxu0 %v314
      %346 = vmatpush1.bf16.msra.mxu0 %v313
      %347 = vmatprep.subr.bf16.mxu0 %v316
      %348 = vmatpush1.bf16.msra.mxu0 %v315
      %349 = vmatprep.subr.bf16.mxu0 %v318
      %350 = vmatpush1.bf16.msra.mxu0 %v317
      %351 = vmatprep.subr.bf16.mxu0 0
      %352 = vmatpush1.bf16.msra.mxu0 0
      %353 = vmatprep.subr.bf16.mxu0 0
      %354 = vmatpush1.bf16.msra.mxu0 0
      %355 = vmatprep.subr.bf16.mxu0 0
      %356 = vmatpush1.bf16.msra.mxu0 0
      %357 = vmatprep.subr.bf16.mxu0 0
      %358 = vmatpush1.bf16.msra.mxu0 0
      %359 = vmatprep.subr.bf16.mxu0 0
      %360 = vmatpush1.bf16.msra.mxu0 0
      %361 = vmatprep.subr.bf16.mxu0 0
      %362 = vmatpush1.bf16.msra.mxu0 0
      %363 = vmatprep.subr.bf16.mxu0 0
      %364 = vmatpush1.bf16.msra.mxu0 0
      %365 = vmatprep.subr.bf16.mxu0 0
      %366 = vmatpush1.bf16.msra.mxu0 0
      %367 = vmatprep.mubr.bf16.mxu0 0
      %368 = vmatmul.mubr.bf16.gmra.mrb[0].mxu0 %v239
      %v369 = vpop.f32.mrb[0].mxu0
      %v370 = vadd.f32 0.0, %v369
      %v371 = vpop.f32.mrb[0].mxu0
      %v372 = vadd.f32 0.0, %v371
      %v373 = vpop.f32.mrb[0].mxu0
      %v374 = vadd.f32 0.0, %v373
      %v375 = vpop.f32.mrb[0].mxu0
      %v376 = vadd.f32 0.0, %v375
      %377 = vmatprep.mubr.bf16.mxu0 0
      %378 = vmatmul.mubr.bf16.gmra.mrb[0].mxu0 %v240
      %v379 = vpop.f32.mrb[0].mxu0
      %v380 = vadd.f32 0.0, %v379
      %v381 = vpop.f32.mrb[0].mxu0
      %v382 = vadd.f32 0.0, %v381
      %v383 = vpop.f32.mrb[0].mxu0
      %v384 = vadd.f32 0.0, %v383
      %v385 = vpop.f32.mrb[0].mxu0
      %v386 = vadd.f32 0.0, %v385
      %387 = vmatprep.mubr.bf16.mxu0 0
      %388 = vmatmul.mubr.bf16.gmra.mrb[0].mxu0 %v241
      %v389 = vpop.f32.mrb[0].mxu0
      %v390 = vadd.f32 0.0, %v389
      %v391 = vpop.f32.mrb[0].mxu0
      %v392 = vadd.f32 0.0, %v391
      %v393 = vpop.f32.mrb[0].mxu0
      %v394 = vadd.f32 0.0, %v393
      %v395 = vpop.f32.mrb[0].mxu0
      %v396 = vadd.f32 0.0, %v395
      %397 = vmatprep.mubr.bf16.mxu0 0
      %398 = vmatmul.mubr.bf16.gmra.mrb[0].mxu0 %v242
      %v399 = vpop.f32.mrb[0].mxu0
      %v400 = vadd.f32 0.0, %v399
      %v401 = vpop.f32.mrb[0].mxu0
      %v402 = vadd.f32 0.0, %v401
      %v403 = vpop.f32.mrb[0].mxu0
      %v404 = vadd.f32 0.0, %v403
      %v405 = vpop.f32.mrb[0].mxu0
      %v406 = vadd.f32 0.0, %v405
      %407 = vmatprep.mubr.bf16.mxu0 0
      %408 = vmatmul.mubr.bf16.gmra.mrb[0].mxu0 %v243
      %v409 = vpop.f32.mrb[0].mxu0
      %v410 = vadd.f32 0.0, %v409
      %v411 = vpop.f32.mrb[0].mxu0
      %v412 = vadd.f32 0.0, %v411
      %v413 = vpop.f32.mrb[0].mxu0
      %v414 = vadd.f32 0.0, %v413
      %v415 = vpop.f32.mrb[0].mxu0
      %v416 = vadd.f32 0.0, %v415
      %417 = vmatprep.mubr.bf16.mxu0 0
      %418 = vmatmul.mubr.bf16.gmra.mrb[0].mxu0 %v244
      %v419 = vpop.f32.mrb[0].mxu0
      %v420 = vadd.f32 0.0, %v419
      %v421 = vpop.f32.mrb[0].mxu0
      %v422 = vadd.f32 0.0, %v421
      %v423 = vpop.f32.mrb[0].mxu0
      %v424 = vadd.f32 0.0, %v423
      %v425 = vpop.f32.mrb[0].mxu0
      %v426 = vadd.f32 0.0, %v425
      %427 = vmatprep.mubr.bf16.mxu0 0
      %428 = vmatmul.mubr.bf16.gmra.mrb[0].mxu0 %v245
      %v429 = vpop.f32.mrb[0].mxu0
      %v430 = vadd.f32 0.0, %v429
      %v431 = vpop.f32.mrb[0].mxu0
      %v432 = vadd.f32 0.0, %v431
      %v433 = vpop.f32.mrb[0].mxu0
      %v434 = vadd.f32 0.0, %v433
      %v435 = vpop.f32.mrb[0].mxu0
      %v436 = vadd.f32 0.0, %v435
      %437 = vmatprep.mubr.bf16.mxu0 0
      %438 = vmatmul.mubr.bf16.gmra.mrb[0].mxu0 %v246
      %v439 = vpop.f32.mrb[0].mxu0
      %v440 = vadd.f32 0.0, %v439
      %v441 = vpop.f32.mrb[0].mxu0
      %v442 = vadd.f32 0.0, %v441
      %v443 = vpop.f32.mrb[0].mxu0
      %v444 = vadd.f32 0.0, %v443
      %v445 = vpop.f32.mrb[0].mxu0
      %v446 = vadd.f32 0.0, %v445
      %447 = vdwg.mxu0
      %v448 = vmul.f32 %v370, 0.5
      %v449 = vmul.f32 %v374, 0.5
      %v450 = vmul.f32 %v380, 0.5
      %v451 = vmul.f32 %v384, 0.5
      %v452 = vmul.f32 %v390, 0.5
      %v453 = vmul.f32 %v394, 0.5
      %v454 = vmul.f32 %v400, 0.5
      %v455 = vmul.f32 %v404, 0.5
      %v456 = vmul.f32 %v410, 0.5
      %v457 = vmul.f32 %v414, 0.5
      %v458 = vmul.f32 %v420, 0.5
      %v459 = vmul.f32 %v424, 0.5
      %v460 = vmul.f32 %v430, 0.5
      %v461 = vmul.f32 %v434, 0.5
      %v462 = vmul.f32 %v440, 0.5
      %v463 = vmul.f32 %v444, 0.5
      %v464 = vmul.f32 %v370, 0.044715
      %v465 = vmul.f32 %v374, 0.044715
      %v466 = vmul.f32 %v380, 0.044715
      %v467 = vmul.f32 %v384, 0.044715
      %v468 = vmul.f32 %v390, 0.044715
      %v469 = vmul.f32 %v394, 0.044715
      %v470 = vmul.f32 %v400, 0.044715
      %v471 = vmul.f32 %v404, 0.044715
      %v472 = vmul.f32 %v410, 0.044715
      %v473 = vmul.f32 %v414, 0.044715
      %v474 = vmul.f32 %v420, 0.044715
      %v475 = vmul.f32 %v424, 0.044715
      %v476 = vmul.f32 %v430, 0.044715
      %v477 = vmul.f32 %v434, 0.044715
      %v478 = vmul.f32 %v440, 0.044715
      %v479 = vmul.f32 %v444, 0.044715
      %v480 = vmul.f32 %v464, %v370
      %v481 = vmul.f32 %v465, %v374
      %v482 = vmul.f32 %v466, %v380
      %v483 = vmul.f32 %v467, %v384
      %v484 = vmul.f32 %v468, %v390
      %v485 = vmul.f32 %v469, %v394
      %v486 = vmul.f32 %v470, %v400
      %v487 = vmul.f32 %v471, %v404
      %v488 = vmul.f32 %v472, %v410
      %v489 = vmul.f32 %v473, %v414
      %v490 = vmul.f32 %v474, %v420
      %v491 = vmul.f32 %v475, %v424
      %v492 = vmul.f32 %v476, %v430
      %v493 = vmul.f32 %v477, %v434
      %v494 = vmul.f32 %v478, %v440
      %v495 = vmul.f32 %v479, %v444
      %v496 = vmul.f32 %v480, %v370
      %v497 = vmul.f32 %v481, %v374
      %v498 = vmul.f32 %v482, %v380
      %v499 = vmul.f32 %v483, %v384
      %v500 = vmul.f32 %v484, %v390
      %v501 = vmul.f32 %v485, %v394
      %v502 = vmul.f32 %v486, %v400
      %v503 = vmul.f32 %v487, %v404
      %v504 = vmul.f32 %v488, %v410
      %v505 = vmul.f32 %v489, %v414
      %v506 = vmul.f32 %v490, %v420
      %v507 = vmul.f32 %v491, %v424
      %v508 = vmul.f32 %v492, %v430
      %v509 = vmul.f32 %v493, %v434
      %v510 = vmul.f32 %v494, %v440
      %v511 = vmul.f32 %v495, %v444
      %v512 = vadd.f32 %v370, %v496
      %v513 = vadd.f32 %v374, %v497
      %v514 = vadd.f32 %v380, %v498
      %v515 = vadd.f32 %v384, %v499
      %v516 = vadd.f32 %v390, %v500
      %v517 = vadd.f32 %v394, %v501
      %v518 = vadd.f32 %v400, %v502
      %v519 = vadd.f32 %v404, %v503
      %v520 = vadd.f32 %v410, %v504
      %v521 = vadd.f32 %v414, %v505
      %v522 = vadd.f32 %v420, %v506
      %v523 = vadd.f32 %v424, %v507
      %v524 = vadd.f32 %v430, %v508
      %v525 = vadd.f32 %v434, %v509
      %v526 = vadd.f32 %v440, %v510
      %v527 = vadd.f32 %v444, %v511
      %v528 = vmul.f32 %v512, 0.7978846
      %v529 = vmul.f32 %v513, 0.7978846
      %v530 = vmul.f32 %v514, 0.7978846
      %v531 = vmul.f32 %v515, 0.7978846
      %v532 = vmul.f32 %v516, 0.7978846
      %v533 = vmul.f32 %v517, 0.7978846
      %v534 = vmul.f32 %v518, 0.7978846
      %v535 = vmul.f32 %v519, 0.7978846
      %v536 = vmul.f32 %v520, 0.7978846
      %v537 = vmul.f32 %v521, 0.7978846
      %v538 = vmul.f32 %v522, 0.7978846
      %v539 = vmul.f32 %v523, 0.7978846
      %v540 = vmul.f32 %v524, 0.7978846
      %v541 = vmul.f32 %v525, 0.7978846
      %v542 = vmul.f32 %v526, 0.7978846
      %v543 = vmul.f32 %v527, 0.7978846
      %v544 = vtanh.pop %v528
      %v545 = vtanh.pop %v529
      %v546 = vtanh.pop %v530
      %v547 = vtanh.pop %v531
      %v548 = vtanh.pop %v532
      %v549 = vtanh.pop %v533
      %v550 = vtanh.pop %v534
      %v551 = vtanh.pop %v535
      %v552 = vtanh.pop %v536
      %v553 = vtanh.pop %v537
      %v554 = vtanh.pop %v538
      %v555 = vtanh.pop %v539
      %v556 = vtanh.pop %v540
      %v557 = vtanh.pop %v541
      %v558 = vtanh.pop %v542
      %v559 = vtanh.pop %v543
      %v560 = vadd.f32 %v544, 1.0
      %v561 = vadd.f32 %v545, 1.0
      %v562 = vadd.f32 %v546, 1.0
      %v563 = vadd.f32 %v547, 1.0
      %v564 = vadd.f32 %v548, 1.0
      %v565 = vadd.f32 %v549, 1.0
      %v566 = vadd.f32 %v550, 1.0
      %v567 = vadd.f32 %v551, 1.0
      %v568 = vadd.f32 %v552, 1.0
      %v569 = vadd.f32 %v553, 1.0
      %v570 = vadd.f32 %v554, 1.0
      %v571 = vadd.f32 %v555, 1.0
      %v572 = vadd.f32 %v556, 1.0
      %v573 = vadd.f32 %v557, 1.0
      %v574 = vadd.f32 %v558, 1.0
      %v575 = vadd.f32 %v559, 1.0
      %v576 = vmul.f32 %v448, %v560
      %v577 = vmul.f32 %v449, %v561
      %v578 = vmul.f32 %v450, %v562
      %v579 = vmul.f32 %v451, %v563
      %v580 = vmul.f32 %v452, %v564
      %v581 = vmul.f32 %v453, %v565
      %v582 = vmul.f32 %v454, %v566
      %v583 = vmul.f32 %v455, %v567
      %v584 = vmul.f32 %v456, %v568
      %v585 = vmul.f32 %v457, %v569
      %v586 = vmul.f32 %v458, %v570
      %v587 = vmul.f32 %v459, %v571
      %v588 = vmul.f32 %v460, %v572
      %v589 = vmul.f32 %v461, %v573
      %v590 = vmul.f32 %v462, %v574
      %v591 = vmul.f32 %v463, %v575
      %v592 = vmul.f32 %v576, %v372
      %v593 = vmul.f32 %v577, %v376
      %v594 = vmul.f32 %v578, %v382
      %v595 = vmul.f32 %v579, %v386
      %v596 = vmul.f32 %v580, %v392
      %v597 = vmul.f32 %v581, %v396
      %v598 = vmul.f32 %v582, %v402
      %v599 = vmul.f32 %v583, %v406
      %v600 = vmul.f32 %v584, %v412
      %v601 = vmul.f32 %v585, %v416
      %v602 = vmul.f32 %v586, %v422
      %v603 = vmul.f32 %v587, %v426
      %v604 = vmul.f32 %v588, %v432
      %v605 = vmul.f32 %v589, %v436
      %v606 = vmul.f32 %v590, %v442
      %v607 = vmul.f32 %v591, %v446
      %v608 = vpack.c.bf16 %v593, %v592
      %v609 = vpack.c.bf16 %v595, %v594
      %v610 = vpack.c.bf16 %v597, %v596
      %v611 = vpack.c.bf16 %v599, %v598
      %v612 = vpack.c.bf16 %v601, %v600
      %v613 = vpack.c.bf16 %v603, %v602
      %v614 = vpack.c.bf16 %v605, %v604
      %v615 = vpack.c.bf16 %v607, %v606
      %v616 = vld [vmem:[%s2] sm:$0xf]
      %v617 = vld [vmem:[%s2 + $0x4] sm:$0xf]
      %v618 = vld [vmem:[%s2 + $0x8] sm:$0xf]
      %v619 = vld [vmem:[%s2 + $0xc] sm:$0xf]
      %v620 = vld [vmem:[%s2 + $0x10] sm:$0xf]
      %v621 = vld [vmem:[%s2 + $0x14] sm:$0xf]
      %v622 = vld [vmem:[%s2 + $0x18] sm:$0xf]
      %v623 = vld [vmem:[%s2 + $0x1c] sm:$0xf]
      %v624 = vld [vmem:[%s2 + $0x20] sm:$0xf]
      %v625 = vld [vmem:[%s2 + $0x24] sm:$0xf]
      %v626 = vld [vmem:[%s2 + $0x28] sm:$0xf]
      %v627 = vld [vmem:[%s2 + $0x2c] sm:$0xf]
      %v628 = vld [vmem:[%s2 + $0x30] sm:$0xf]
      %v629 = vld [vmem:[%s2 + $0x34] sm:$0xf]
      %v630 = vld [vmem:[%s2 + $0x38] sm:$0xf]
      %v631 = vld [vmem:[%s2 + $0x3c] sm:$0xf]
      %v648 = vunpack.c.l.b16 %v616
      %v649 = vunpack.c.l.b16 %v617
      %v650 = vunpack.c.l.b16 %v618
      %v651 = vunpack.c.l.b16 %v619
      %v652 = vunpack.c.l.b16 %v620
      %v653 = vunpack.c.l.b16 %v621
      %v654 = vunpack.c.l.b16 %v622
      %v655 = vunpack.c.l.b16 %v623
      %v656 = vunpack.c.l.b16 %v624
      %v657 = vunpack.c.l.b16 %v625
      %v658 = vunpack.c.l.b16 %v626
      %v659 = vunpack.c.l.b16 %v627
      %v660 = vunpack.c.l.b16 %v628
      %v661 = vunpack.c.l.b16 %v629
      %v662 = vunpack.c.l.b16 %v630
      %v663 = vunpack.c.l.b16 %v631
      %v664 = vpack.c.b16 %v649, %v648
      %v665 = vpack.c.b16 %v651, %v650
      %v666 = vpack.c.b16 %v653, %v652
      %v667 = vpack.c.b16 %v655, %v654
      %v668 = vpack.c.b16 %v657, %v656
      %v669 = vpack.c.b16 %v659, %v658
      %v670 = vpack.c.b16 %v661, %v660
      %v671 = vpack.c.b16 %v663, %v662
      %680 = vmatprep.subr.bf16.mxu0 0
      %681 = vmatpush1.bf16.msra.mxu0 %v664
      %682 = vmatprep.subr.bf16.mxu0 0
      %683 = vmatpush1.bf16.msra.mxu0 %v665
      %684 = vmatprep.subr.bf16.mxu0 0
      %685 = vmatpush1.bf16.msra.mxu0 %v666
      %686 = vmatprep.subr.bf16.mxu0 0
      %687 = vmatpush1.bf16.msra.mxu0 %v667
      %688 = vmatprep.subr.bf16.mxu0 0
      %689 = vmatpush1.bf16.msra.mxu0 %v668
      %690 = vmatprep.subr.bf16.mxu0 0
      %691 = vmatpush1.bf16.msra.mxu0 %v669
      %692 = vmatprep.subr.bf16.mxu0 0
      %693 = vmatpush1.bf16.msra.mxu0 %v670
      %694 = vmatprep.subr.bf16.mxu0 0
      %695 = vmatpush1.bf16.msra.mxu0 %v671
      %696 = vmatprep.subr.bf16.mxu0 0
      %697 = vmatpush1.bf16.msra.mxu0 0
      %698 = vmatprep.subr.bf16.mxu0 0
      %699 = vmatpush1.bf16.msra.mxu0 0
      %700 = vmatprep.subr.bf16.mxu0 0
      %701 = vmatpush1.bf16.msra.mxu0 0
      %702 = vmatprep.subr.bf16.mxu0 0
      %703 = vmatpush1.bf16.msra.mxu0 0
      %704 = vmatprep.subr.bf16.mxu0 0
      %705 = vmatpush1.bf16.msra.mxu0 0
      %706 = vmatprep.subr.bf16.mxu0 0
      %707 = vmatpush1.bf16.msra.mxu0 0
      %708 = vmatprep.subr.bf16.mxu0 0
      %709 = vmatpush1.bf16.msra.mxu0 0
      %710 = vmatprep.subr.bf16.mxu0 0
      %711 = vmatpush1.bf16.msra.mxu0 0
      %712 = vmatprep.mubr.bf16.mxu0 0
      %713 = vmatmul.mubr.bf16.gmra.mrb[0].mxu0 %v608
      %v714 = vpop.f32.mrb[0].mxu0
      %v715 = vadd.f32 0.0, %v714
      %v716 = vpop.f32.mrb[0].mxu0
      %v717 = vpop.f32.mrb[0].mxu0
      %v718 = vadd.f32 0.0, %v717
      %v719 = vpop.f32.mrb[0].mxu0
      %720 = vmatprep.mubr.bf16.mxu0 0
      %721 = vmatmul.mubr.bf16.gmra.mrb[0].mxu0 %v609
      %v722 = vpop.f32.mrb[0].mxu0
      %v723 = vadd.f32 0.0, %v722
      %v724 = vpop.f32.mrb[0].mxu0
      %v725 = vpop.f32.mrb[0].mxu0
      %v726 = vadd.f32 0.0, %v725
      %v727 = vpop.f32.mrb[0].mxu0
      %728 = vmatprep.mubr.bf16.mxu0 0
      %729 = vmatmul.mubr.bf16.gmra.mrb[0].mxu0 %v610
      %v730 = vpop.f32.mrb[0].mxu0
      %v731 = vadd.f32 0.0, %v730
      %v732 = vpop.f32.mrb[0].mxu0
      %v733 = vpop.f32.mrb[0].mxu0
      %v734 = vadd.f32 0.0, %v733
      %v735 = vpop.f32.mrb[0].mxu0
      %736 = vmatprep.mubr.bf16.mxu0 0
      %737 = vmatmul.mubr.bf16.gmra.mrb[0].mxu0 %v611
      %v738 = vpop.f32.mrb[0].mxu0
      %v739 = vadd.f32 0.0, %v738
      %v740 = vpop.f32.mrb[0].mxu0
      %v741 = vpop.f32.mrb[0].mxu0
      %v742 = vadd.f32 0.0, %v741
      %v743 = vpop.f32.mrb[0].mxu0
      %744 = vmatprep.mubr.bf16.mxu0 0
      %745 = vmatmul.mubr.bf16.gmra.mrb[0].mxu0 %v612
      %v746 = vpop.f32.mrb[0].mxu0
      %v747 = vadd.f32 0.0, %v746
      %v748 = vpop.f32.mrb[0].mxu0
      %v749 = vpop.f32.mrb[0].mxu0
      %v750 = vadd.f32 0.0, %v749
      %v751 = vpop.f32.mrb[0].mxu0
      %752 = vmatprep.mubr.bf16.mxu0 0
      %753 = vmatmul.mubr.bf16.gmra.mrb[0].mxu0 %v613
      %v754 = vpop.f32.mrb[0].mxu0
      %v755 = vadd.f32 0.0, %v754
      %v756 = vpop.f32.mrb[0].mxu0
      %v757 = vpop.f32.mrb[0].mxu0
      %v758 = vadd.f32 0.0, %v757
      %v759 = vpop.f32.mrb[0].mxu0
      %760 = vmatprep.mubr.bf16.mxu0 0
      %761 = vmatmul.mubr.bf16.gmra.mrb[0].mxu0 %v614
      %v762 = vpop.f32.mrb[0].mxu0
      %v763 = vadd.f32 0.0, %v762
      %v764 = vpop.f32.mrb[0].mxu0
      %v765 = vpop.f32.mrb[0].mxu0
      %v766 = vadd.f32 0.0, %v765
      %v767 = vpop.f32.mrb[0].mxu0
      %768 = vmatprep.mubr.bf16.mxu0 0
      %769 = vmatmul.mubr.bf16.gmra.mrb[0].mxu0 %v615
      %v770 = vpop.f32.mrb[0].mxu0
      %v771 = vadd.f32 0.0, %v770
      %v772 = vpop.f32.mrb[0].mxu0
      %v773 = vpop.f32.mrb[0].mxu0
      %v774 = vadd.f32 0.0, %v773
      %v775 = vpop.f32.mrb[0].mxu0
      %776 = vdwg.mxu0
      %v777 = vpack.c.bf16 %v718, %v715
      %v778 = vpack.c.bf16 %v726, %v723
      %v779 = vpack.c.bf16 %v734, %v731
      %v780 = vpack.c.bf16 %v742, %v739
      %v781 = vpack.c.bf16 %v750, %v747
      %v782 = vpack.c.bf16 %v758, %v755
      %v783 = vpack.c.bf16 %v766, %v763
      %v784 = vpack.c.bf16 %v774, %v771
      %v793 = vunpack.c.l.b16 %v777
      %v794 = vunpack.c.h.b16 %v777
      %v795 = vunpack.c.l.b16 %v778
      %v796 = vunpack.c.h.b16 %v778
      %v797 = vunpack.c.l.b16 %v779
      %v798 = vunpack.c.h.b16 %v779
      %v799 = vunpack.c.l.b16 %v780
      %v800 = vunpack.c.h.b16 %v780
      %v801 = vunpack.c.l.b16 %v781
      %v802 = vunpack.c.h.b16 %v781
      %v803 = vunpack.c.l.b16 %v782
      %v804 = vunpack.c.h.b16 %v782
      %v805 = vunpack.c.l.b16 %v783
      %v806 = vunpack.c.h.b16 %v783
      %v807 = vunpack.c.l.b16 %v784
      %v808 = vunpack.c.h.b16 %v784
      %v809 = vpack.c.b16 %v793, %v793
      %v810 = vpack.c.b16 %v794, %v794
      %v811 = vpack.c.b16 %v795, %v795
      %v812 = vpack.c.b16 %v796, %v796
      %v813 = vpack.c.b16 %v797, %v797
      %v814 = vpack.c.b16 %v798, %v798
      %v815 = vpack.c.b16 %v799, %v799
      %v816 = vpack.c.b16 %v800, %v800
      %v817 = vpack.c.b16 %v801, %v801
      %v818 = vpack.c.b16 %v802, %v802
      %v819 = vpack.c.b16 %v803, %v803
      %v820 = vpack.c.b16 %v804, %v804
      %v821 = vpack.c.b16 %v805, %v805
      %v822 = vpack.c.b16 %v806, %v806
      %v823 = vpack.c.b16 %v807, %v807
      %v824 = vpack.c.b16 %v808, %v808
      %841 = vst [vmem:[%s172] sm:$0xf] %v809
      %842 = vst [vmem:[%s172 + $0x4] sm:$0xf] %v810
      %843 = vst [vmem:[%s172 + $0x8] sm:$0xf] %v811
      %844 = vst [vmem:[%s172 + $0xc] sm:$0xf] %v812
      %845 = vst [vmem:[%s172 + $0x10] sm:$0xf] %v813
      %846 = vst [vmem:[%s172 + $0x14] sm:$0xf] %v814
      %847 = vst [vmem:[%s172 + $0x18] sm:$0xf] %v815
      %848 = vst [vmem:[%s172 + $0x1c] sm:$0xf] %v816
      %849 = vst [vmem:[%s172 + $0x20] sm:$0xf] %v817
      %850 = vst [vmem:[%s172 + $0x24] sm:$0xf] %v818
      %851 = vst [vmem:[%s172 + $0x28] sm:$0xf] %v819
      %852 = vst [vmem:[%s172 + $0x2c] sm:$0xf] %v820
      %853 = vst [vmem:[%s172 + $0x30] sm:$0xf] %v821
      %854 = vst [vmem:[%s172 + $0x34] sm:$0xf] %v822
      %855 = vst [vmem:[%s172 + $0x38] sm:$0xf] %v823
      %856 = vst [vmem:[%s172 + $0x3c] sm:$0xf] %v824
      %s857 = smul.u32 16, %s14
      %p858 = scmp.lt.s32.totalorder %s857, 63
      %s859 = scalar_select %p858, %s857, 63
      %s860 = smul.addr %s859, 4
      %s861 = scalar_lea.vmem %s3, %s860
      // Predicated region
      $region33: #{gcfn3d_pallas.1} parent=31 // pred_check
        %p862 = pneg %p100
      $region34: #{gcfn3d_pallas.1} parent=31 // pred_check_branch
        %864 = sbr.rel (%p862) target = $region36
      $region35: #{gcfn3d_pallas.1} parent=31 // pred_region
        %s865 = smul.u32 16, %s14
      $region36: #{gcfn3d_pallas.1} parent=31 // pred_fallthru
        _
    $region32: #{gcfn3d_pallas.1} parent=5 // pred_fallthru
      _
    %p866 = scmp.le.s32.totalorder 2, %s9
    // Predicated region
    $region37: #{gcfn3d_pallas.1} parent=5 // pred_check
      %p867 = pneg %p866
    $region38: #{gcfn3d_pallas.1} parent=5 // pred_check_branch
      %869 = sbr.rel (%p867) target = $region40
    $region39: #{gcfn3d_pallas.1} parent=5 // pred_region
      %s870 = ssub.s32 %s9, 2
      // Predicated region
      $region41: #{gcfn3d_pallas.1} parent=39 // pred_check
        %p871 = pneg %p106
      $region42: #{gcfn3d_pallas.1} parent=39 // pred_check_branch
        %873 = sbr.rel (%p871) target = $region44
      $region43: #{gcfn3d_pallas.1} parent=39 // pred_region
        %s874 = smul.u32 16, %s15
        %p875 = scmp.lt.s32.totalorder %s874, 63
        %s876 = scalar_select %p875, %s874, 63
        %s877 = smul.addr %s876, 4
        %s878 = scalar_lea.vmem %s3, %s877
      $region44: #{gcfn3d_pallas.1} parent=39 // pred_fallthru
        _
    $region40: #{gcfn3d_pallas.1} parent=5 // pred_fallthru
      _
  $region6: #{gcfn3d_pallas.1} parent=0 // loop_footer
    %s13 = sadd.s32 1, %s9
  $region7: #{gcfn3d_pallas.1} parent=0 // loop_footer_branch
    %8 = sbr.rel target = $region3
  $region8: #{gcfn3d_pallas.1} parent=0 // loop_exit
    _

</llo_original>
